<compile_context>
chip_gen: v6e
topology: v6e:2x2x1
jax: 0.10.0
libtpu: 0.0.40
codegen_flags: <defaults>
</compile_context>

<pallas_src>
import jax
import jax.numpy as jnp
from jax import lax
from jax.experimental import pallas as pl
from jax.experimental.pallas import tpu as pltpu

H1 = 10  # hidden widths of the reference nn.Sequential
H2 = 10
OUT = 1


def mlp_kernel(x_ref, w1_ref, b1_ref, w2_ref, b2_ref, w3t_ref, b3_ref, o_ref):
    # Whole MLP hot path on one (TB, K) batch tile, all on-chip.
    x = x_ref[...]                                   # (TB, K), f32 or bf16

    h1 = jnp.dot(x, w1_ref[...], preferred_element_type=jnp.float32) + b1_ref[...]
    h1 = jnp.maximum(h1, 0.0)                        # (TB, 10) f32

    h2 = jnp.dot(h1, w2_ref[...], preferred_element_type=jnp.float32) + b2_ref[...]
    h2 = jnp.maximum(h2, 0.0)                        # (TB, 10) f32

    # Final 1-wide layer in transposed (batch-on-lanes) form:
    # (1, TB) = w3^T (1,10) contracted with h2 (TB,10) over the hidden dim
    # (rhs-transposed MXU matmul; no explicit data transpose).
    out_t = lax.dot_general(
        w3t_ref[...], h2,
        dimension_numbers=(((1,), (1,)), ((), ())),
        preferred_element_type=jnp.float32,
    ) + b3_ref[...]                                  # (1, TB) + (1, 1)

    o_ref[...] = out_t.astype(o_ref.dtype)           # lane-dense (1, TB) store


def mlp_forward(x, params, tb=2048, cast_to_bf16=True):
    w1, b1, w2, b2, w3, b3 = params
    B, K = x.shape

    # Stream x / w1 as bf16 (halves the dominant HBM read stream); f32 accumulate.
    if cast_to_bf16 and x.dtype == jnp.float32:
        x = x.astype(jnp.bfloat16)
        w1 = w1.astype(jnp.bfloat16)

    w3t = w3.T                                       # (1, 10) for the transposed final dot

    itemsize = jnp.dtype(x.dtype).itemsize
    # Batch tile: multiple of 128 (lane-dense (1, TB) output blocks), capped so
    # double-buffered x tiles stay ~24 MiB -> fits default scoped VMEM on
    # v5e/v6e and well under v7x's 64 MiB physical VMEM without raising limits.
    tb = max(128, (int(tb) // 128) * 128)
    max_rows = max(128, ((12 << 20) // max(K * itemsize, 1)) // 128 * 128)
    tb = min(tb, max_rows)
    if tb >= B:
        tb = B                                       # single full-extent tile, no padding needed
    grid = (pl.cdiv(B, tb),)                         # ragged last block handled by Pallas

    resident = lambda a: pl.BlockSpec(a.shape, lambda i: (0,) * a.ndim)

    w_bytes = sum(int(a.size) * jnp.dtype(a.dtype).itemsize
                  for a in (w1, b1, w2, b2, w3t, b3))
    cost = pl.CostEstimate(
        flops=2 * B * (K * H1 + H1 * H2 + H2 * OUT),
        transcendentals=0,
        bytes_accessed=B * K * itemsize + B * 4 + w_bytes,
    )

    out_t = pl.pallas_call(
        mlp_kernel,
        out_shape=jax.ShapeDtypeStruct((1, B), jnp.float32),   # pinned f32, compact
        grid=grid,
        in_specs=[
            pl.BlockSpec((tb, K), lambda i: (i, 0)),   # streamed batch tile (auto double-buffered)
            resident(w1), resident(b1),                # ~2 KB of weights, VMEM-resident
            resident(w2), resident(b2),
            resident(w3t), resident(b3),
        ],
        out_specs=pl.BlockSpec((1, tb), lambda i: (0, i)),      # lane-dense batch-on-lanes output
        compiler_params=pltpu.CompilerParams(
            dimension_semantics=("parallel",),         # shard batch tiles across TCs (v7x)
        ),
        cost_estimate=cost,
    )(x, w1, b1, w2, b2, w3t, b3)

    return out_t.reshape(B, 1)


def init_params(key, input_size):
    # Deterministic init mimicking PyTorch's Linear default (uniform +/- 1/sqrt(fan_in)).
    def linear(k, fan_in, fan_out):
        kw, kb = jax.random.split(k)
        bound = 1.0 / jnp.sqrt(fan_in)
        w = jax.random.uniform(kw, (fan_in, fan_out), jnp.float32, -bound, bound)
        b = jax.random.uniform(kb, (1, fan_out), jnp.float32, -bound, bound)
        return w, b

    k1, k2, k3 = jax.random.split(key, 3)
    w1, b1 = linear(k1, input_size, H1)
    w2, b2 = linear(k2, H1, H2)
    w3, b3 = linear(k3, H2, OUT)
    return (w1, b1, w2, b2, w3, b3)


def _reference(x, params):
    w1, b1, w2, b2, w3, b3 = params
    h = jnp.maximum(x @ w1 + b1, 0.0)
    h = jnp.maximum(h @ w2 + b2, 0.0)
    return h @ w3 + b3


if __name__ == "__main__":
    key = jax.random.PRNGKey(0)
    k_x, k_x2, k_p = jax.random.split(key, 3)

    batch, input_size = 8, 32
    params = init_params(k_p, input_size)

    # Exact f32 path, single full-extent tile.
    x = jax.random.normal(k_x, (batch, input_size), jnp.float32)
    out = mlp_forward(x, params, cast_to_bf16=False)
    jax.block_until_ready(out)
    ref = _reference(x, params)
    assert out.shape == (batch, 1)
    assert jnp.allclose(out, ref, atol=1e-5, rtol=1e-5)

    # Default bf16-streaming path: 3 grid steps with a ragged last block.
    batch2 = 521
    x2 = jax.random.normal(k_x2, (batch2, input_size), jnp.float32)
    out2 = mlp_forward(x2, params, tb=256)
    jax.block_until_ready(out2)
    ref2 = _reference(x2, params)
    assert out2.shape == (batch2, 1)
    assert jnp.allclose(out2, ref2, atol=3e-2, rtol=3e-2)  # bf16 inputs -> looser tolerance

    print("KERNEL_OK")
</pallas_src>

<mosaic_0001>
module attributes {stable_mosaic.version = 11 : i64} {
  func.func @mlp_kernel(%arg0: i32, %arg1: memref<8x32xf32, #tpu.memory_space<vmem>>, %arg2: memref<32x10xf32, #tpu.memory_space<vmem>>, %arg3: memref<1x10xf32, #tpu.memory_space<vmem>>, %arg4: memref<10x10xf32, #tpu.memory_space<vmem>>, %arg5: memref<1x10xf32, #tpu.memory_space<vmem>>, %arg6: memref<1x10xf32, #tpu.memory_space<vmem>>, %arg7: memref<1x1xf32, #tpu.memory_space<vmem>>, %arg8: memref<1x8xf32, #tpu.memory_space<vmem>>) attributes {dimension_semantics = [#tpu.dimension_semantics<parallel>], iteration_bounds = array<i64: 1>, scalar_prefetch = 0 : i64, scratch_operands = 0 : i64, tpu.core_type = #tpu.core_type<tc>, window_params = [{transform_indices = @transform_0, window_bounds = array<i64: 8, 32>}, {pipeline_mode = #tpu.pipeline_mode<synchronous>, transform_indices = @transform_1, window_bounds = array<i64: 32, 10>}, {pipeline_mode = #tpu.pipeline_mode<synchronous>, transform_indices = @transform_2, window_bounds = array<i64: 1, 10>}, {pipeline_mode = #tpu.pipeline_mode<synchronous>, transform_indices = @transform_3, window_bounds = array<i64: 10, 10>}, {pipeline_mode = #tpu.pipeline_mode<synchronous>, transform_indices = @transform_4, window_bounds = array<i64: 1, 10>}, {pipeline_mode = #tpu.pipeline_mode<synchronous>, transform_indices = @transform_5, window_bounds = array<i64: 1, 10>}, {pipeline_mode = #tpu.pipeline_mode<synchronous>, transform_indices = @transform_6, window_bounds = array<i64: 1, 1>}, {transform_indices = @transform_7, window_bounds = array<i64: 1, 8>}]} {
    %c0 = arith.constant 0 : index
    %c0_0 = arith.constant 0 : index
    %0 = vector.load %arg1[%c0, %c0_0] : memref<8x32xf32, #tpu.memory_space<vmem>>, vector<8x32xf32>
    %c0_1 = arith.constant 0 : index
    %c0_2 = arith.constant 0 : index
    %1 = vector.load %arg2[%c0_1, %c0_2] : memref<32x10xf32, #tpu.memory_space<vmem>>, vector<32x10xf32>
    %cst = arith.constant dense<0.000000e+00> : vector<8x10xf32>
    %2 = tpu.matmul %0, %1, %cst {dimension_numbers = #tpu.dot_dimension_numbers<[1], [0], [0], [1], [0, 0, 1, 1], [], []>} : vector<8x32xf32>, vector<32x10xf32>, vector<8x10xf32> -> vector<8x10xf32>
    %c0_3 = arith.constant 0 : index
    %c0_4 = arith.constant 0 : index
    %3 = vector.load %arg3[%c0_3, %c0_4] : memref<1x10xf32, #tpu.memory_space<vmem>>, vector<1x10xf32>
    %4 = vector.broadcast %3 : vector<1x10xf32> to vector<8x10xf32>
    %5 = arith.addf %2, %4 : vector<8x10xf32>
    %cst_5 = arith.constant 0.000000e+00 : f32
    %6 = vector.broadcast %cst_5 : f32 to vector<8x10xf32>
    %7 = arith.maximumf %5, %6 : vector<8x10xf32>
    %c0_6 = arith.constant 0 : index
    %c0_7 = arith.constant 0 : index
    %8 = vector.load %arg4[%c0_6, %c0_7] : memref<10x10xf32, #tpu.memory_space<vmem>>, vector<10x10xf32>
    %cst_8 = arith.constant dense<0.000000e+00> : vector<8x10xf32>
    %9 = tpu.matmul %7, %8, %cst_8 {dimension_numbers = #tpu.dot_dimension_numbers<[1], [0], [0], [1], [0, 0, 1, 1], [], []>} : vector<8x10xf32>, vector<10x10xf32>, vector<8x10xf32> -> vector<8x10xf32>
    %c0_9 = arith.constant 0 : index
    %c0_10 = arith.constant 0 : index
    %10 = vector.load %arg5[%c0_9, %c0_10] : memref<1x10xf32, #tpu.memory_space<vmem>>, vector<1x10xf32>
    %11 = vector.broadcast %10 : vector<1x10xf32> to vector<8x10xf32>
    %12 = arith.addf %9, %11 : vector<8x10xf32>
    %cst_11 = arith.constant 0.000000e+00 : f32
    %13 = vector.broadcast %cst_11 : f32 to vector<8x10xf32>
    %14 = arith.maximumf %12, %13 : vector<8x10xf32>
    %c0_12 = arith.constant 0 : index
    %c0_13 = arith.constant 0 : index
    %15 = vector.load %arg6[%c0_12, %c0_13] : memref<1x10xf32, #tpu.memory_space<vmem>>, vector<1x10xf32>
    %cst_14 = arith.constant dense<0.000000e+00> : vector<1x8xf32>
    %16 = tpu.matmul %15, %14, %cst_14 {dimension_numbers = #tpu.dot_dimension_numbers<[1], [1], [0], [0], [0, 0, 1, 0], [], []>} : vector<1x10xf32>, vector<8x10xf32>, vector<1x8xf32> -> vector<1x8xf32>
    %c0_15 = arith.constant 0 : index
    %c0_16 = arith.constant 0 : index
    %17 = vector.load %arg7[%c0_15, %c0_16] : memref<1x1xf32, #tpu.memory_space<vmem>>, vector<1x1xf32>
    %18 = vector.broadcast %17 : vector<1x1xf32> to vector<1x8xf32>
    %19 = arith.addf %16, %18 : vector<1x8xf32>
    %c0_17 = arith.constant 0 : index
    %c0_18 = arith.constant 0 : index
    %20 = vector.load %arg8[%c0_17, %c0_18] : memref<1x8xf32, #tpu.memory_space<vmem>>, vector<1x8xf32>
    tpu.vector_store %arg8[%c0_17, %c0_18], %19 {strides = array<i32>} : memref<1x8xf32, #tpu.memory_space<vmem>>, vector<1x8xf32>,
    return
  }
  func.func @transform_0(%arg0: i32) -> (i32, i32) {
    %c0_i32 = arith.constant 0 : i32
    %c0_i32_0 = arith.constant 0 : i32
    return %arg0, %c0_i32 : i32, i32
  }
  func.func @transform_1(%arg0: i32) -> (i32, i32) {
    %c0_i32 = arith.constant 0 : i32
    %c0_i32_0 = arith.constant 0 : i32
    %c0_i32_1 = arith.constant 0 : i32
    return %c0_i32, %c0_i32_0 : i32, i32
  }
  func.func @transform_2(%arg0: i32) -> (i32, i32) {
    %c0_i32 = arith.constant 0 : i32
    %c0_i32_0 = arith.constant 0 : i32
    %c0_i32_1 = arith.constant 0 : i32
    return %c0_i32, %c0_i32_0 : i32, i32
  }
  func.func @transform_3(%arg0: i32) -> (i32, i32) {
    %c0_i32 = arith.constant 0 : i32
    %c0_i32_0 = arith.constant 0 : i32
    %c0_i32_1 = arith.constant 0 : i32
    return %c0_i32, %c0_i32_0 : i32, i32
  }
  func.func @transform_4(%arg0: i32) -> (i32, i32) {
    %c0_i32 = arith.constant 0 : i32
    %c0_i32_0 = arith.constant 0 : i32
    %c0_i32_1 = arith.constant 0 : i32
    return %c0_i32, %c0_i32_0 : i32, i32
  }
  func.func @transform_5(%arg0: i32) -> (i32, i32) {
    %c0_i32 = arith.constant 0 : i32
    %c0_i32_0 = arith.constant 0 : i32
    %c0_i32_1 = arith.constant 0 : i32
    return %c0_i32, %c0_i32_0 : i32, i32
  }
  func.func @transform_6(%arg0: i32) -> (i32, i32) {
    %c0_i32 = arith.constant 0 : i32
    %c0_i32_0 = arith.constant 0 : i32
    %c0_i32_1 = arith.constant 0 : i32
    return %c0_i32, %c0_i32_0 : i32, i32
  }
  func.func @transform_7(%arg0: i32) -> (i32, i32) {
    %c0_i32 = arith.constant 0 : i32
    %c0_i32_0 = arith.constant 0 : i32
    return %c0_i32, %arg0 : i32, i32
  }
}

</mosaic_0001>

<llo_original>
// kernel: tpu_custom_call.1
$region0: #{tpu_custom_call.1}
  #allocation0 [shape = 'u32[]', space=smem, size = 0x4, offset = 0x4, fixed_abs, tag = 'smem constant byte address 0x4 - core index']
  #allocation1 [shape = 'u32[144,128]{1,0:T(1,128)}', space=vmem, size = 0x12000, scoped, tag = 'internal scratch']
  #allocation2 [shape = 'f32[1,1]{1,0:T(1,128)S(1)}', space=vmem, size = 0x200, scoped, tag = 'scoped memory for tpu_custom_call.1']
  %s0 = inlined_call_operand.vmem [shape: f32[8,32], index: 0, kind: input, shape index: {}]
  %s1 = inlined_call_operand.vmem [shape: f32[32,10], index: 1, kind: input, shape index: {}]
  %s2 = inlined_call_operand.vmem [shape: f32[1,10], index: 2, kind: input, shape index: {}]
  %s3 = inlined_call_operand.vmem [shape: f32[10,10], index: 3, kind: input, shape index: {}]
  %s4 = inlined_call_operand.vmem [shape: f32[1,10], index: 4, kind: input, shape index: {}]
  %s5 = inlined_call_operand.vmem [shape: f32[1,10], index: 5, kind: input, shape index: {}]
  %s6 = inlined_call_operand.<no memory space> [shape: f32[1,1], index: 6, kind: input, shape index: {}]
  %s7 = inlined_call_operand.hbm [shape: f32[1,8], index: 7, kind: output, shape index: {}]
  %s8 = sld [smem:[#allocation0]]
  $region38: #{tpu_custom_call.1} parent=0
    _
  %s10 = ssub.s32 1, %s8
  %s11 = scalar_select 0, %s10, %s8
  %v12 = vstv %s6
  %13 = vst [vmem:[#allocation2] sm:$0x1] %v12
  $region1: #{tpu_custom_call.1} parent=0
    #allocation3 [shape = 'u8[512]{0}', space=vmem, size = 0x400, scoped, tag = 'output window, operand 0, single buffered']
    #allocation4 [shape = 's32[1]{0}', space=sflag, size = 0x4, scoped, tag = 'scoped memory for tpu_custom_call.1']
    %14 = vsyncpa [#allocation4], 0
    // Predicated region
    $region2: #{tpu_custom_call.1} parent=1 // pred_check
      _
    $region3: #{tpu_custom_call.1} parent=1 // pred_check_branch
      %16 = sbr.rel (0) target = $region5
    $region4: #{tpu_custom_call.1} parent=1 // pred_region
      _
    $region5: #{tpu_custom_call.1} parent=1 // pred_fallthru
      _
    // Predicated region
    $region6: #{tpu_custom_call.1} parent=1 // pred_check
      _
    $region7: #{tpu_custom_call.1} parent=1 // pred_check_branch
      %18 = sbr.rel (0) target = $region9
    $region8: #{tpu_custom_call.1} parent=1 // pred_region
      _
    $region9: #{tpu_custom_call.1} parent=1 // pred_fallthru
      _
    // Predicated region
    $region10: #{tpu_custom_call.1} parent=1 // pred_check
      _
    $region11: #{tpu_custom_call.1} parent=1 // pred_check_branch
      %20 = sbr.rel (0) target = $region13
    $region12: #{tpu_custom_call.1} parent=1 // pred_region
      _
    $region13: #{tpu_custom_call.1} parent=1 // pred_fallthru
      _
    // Predicated region
    $region14: #{tpu_custom_call.1} parent=1 // pred_check
      _
    $region15: #{tpu_custom_call.1} parent=1 // pred_check_branch
      %22 = sbr.rel (0) target = $region17
    $region16: #{tpu_custom_call.1} parent=1 // pred_region
      _
    $region17: #{tpu_custom_call.1} parent=1 // pred_fallthru
      _
    // Predicated region
    $region18: #{tpu_custom_call.1} parent=1 // pred_check
      _
    $region19: #{tpu_custom_call.1} parent=1 // pred_check_branch
      %24 = sbr.rel (0) target = $region21
    $region20: #{tpu_custom_call.1} parent=1 // pred_region
      _
    $region21: #{tpu_custom_call.1} parent=1 // pred_fallthru
      _
    // Predicated region
    $region22: #{tpu_custom_call.1} parent=1 // pred_check
      _
    $region23: #{tpu_custom_call.1} parent=1 // pred_check_branch
      %26 = sbr.rel (0) target = $region25
    $region24: #{tpu_custom_call.1} parent=1 // pred_region
      _
    $region25: #{tpu_custom_call.1} parent=1 // pred_fallthru
      _
    // Predicated region
    $region26: #{tpu_custom_call.1} parent=1 // pred_check
      _
    $region27: #{tpu_custom_call.1} parent=1 // pred_check_branch
      %28 = sbr.rel (0) target = $region29
    $region28: #{tpu_custom_call.1} parent=1 // pred_region
      _
    $region29: #{tpu_custom_call.1} parent=1 // pred_fallthru
      _
    %v29 = vld [vmem:[%s0] sm:$0xff]
    %v30 = vld [vmem:[%s1] sm:$0xff]
    %v31 = vld [vmem:[%s1 + $0x8] sm:$0xff]
    %v32 = vld [vmem:[%s1 + $0x10] sm:$0xff]
    %v33 = vld [vmem:[%s1 + $0x18] sm:$0xff]
    %v34 = vld [vmem:[%s2] sm:$0x1]
    %v36 = vlaneseq
    %v37 = vshrl.u32 %v36, 7
    %v38 = vsub.s32 0, %v37
    %v39 = vrot.slane %v34, %v38
    %vm41 = vcmask 261120
    %v43 = vsel %vm41, %v29, 0
    %45 = vmatprep.subr.mxu0 0.0
    %46 = vmatpush1.msra.mxu0 0.0
    %47 = vmatprep.subr.mxu0 0.0
    %48 = vmatpush1.msra.mxu0 0.0
    %49 = vmatprep.subr.mxu0 0.0
    %50 = vmatpush1.msra.mxu0 0.0
    %51 = vmatprep.subr.mxu0 0.0
    %52 = vmatpush1.msra.mxu0 0.0
    %53 = vmatprep.subr.mxu0 0.0
    %54 = vmatpush1.msra.mxu0 0.0
    %55 = vmatprep.subr.mxu0 0.0
    %56 = vmatpush1.msra.mxu0 0.0
    %57 = vmatprep.subr.mxu0 0.0
    %58 = vmatpush1.msra.mxu0 0.0
    %59 = vmatprep.subr.mxu0 0.0
    %60 = vmatpush1.msra.mxu0 0.0
    %61 = vmatprep.subr.mxu0 0.0
    %62 = vmatpush1.msra.mxu0 0.0
    %63 = vmatprep.subr.mxu0 0.0
    %64 = vmatpush1.msra.mxu0 0.0
    %65 = vmatprep.subr.mxu0 0.0
    %66 = vmatpush1.msra.mxu0 0.0
    %67 = vmatprep.subr.mxu0 0.0
    %68 = vmatpush1.msra.mxu0 0.0
    %69 = vmatprep.subr.mxu0 0.0
    %70 = vmatpush1.msra.mxu0 %v33
    %71 = vmatprep.subr.mxu0 0.0
    %72 = vmatpush1.msra.mxu0 %v32
    %73 = vmatprep.subr.mxu0 0.0
    %74 = vmatpush1.msra.mxu0 %v31
    %75 = vmatprep.subr.mxu0 0.0
    %76 = vmatpush1.msra.mxu0 %v30
    %77 = vmatprep.subr.mxu0 0.0
    %78 = vmatpush2.msra.mxu0 0.0
    %79 = vmatprep.subr.mxu0 0.0
    %80 = vmatpush2.msra.mxu0 0.0
    %81 = vmatprep.subr.mxu0 0.0
    %82 = vmatpush2.msra.mxu0 0.0
    %83 = vmatprep.subr.mxu0 0.0
    %84 = vmatpush2.msra.mxu0 0.0
    %85 = vmatprep.subr.mxu0 0.0
    %86 = vmatpush2.msra.mxu0 0.0
    %87 = vmatprep.subr.mxu0 0.0
    %88 = vmatpush2.msra.mxu0 0.0
    %89 = vmatprep.subr.mxu0 0.0
    %90 = vmatpush2.msra.mxu0 0.0
    %91 = vmatprep.subr.mxu0 0.0
    %92 = vmatpush2.msra.mxu0 0.0
    %93 = vmatprep.subr.mxu0 0.0
    %94 = vmatpush2.msra.mxu0 0.0
    %95 = vmatprep.subr.mxu0 0.0
    %96 = vmatpush2.msra.mxu0 0.0
    %97 = vmatprep.subr.mxu0 0.0
    %98 = vmatpush2.msra.mxu0 0.0
    %99 = vmatprep.subr.mxu0 0.0
    %100 = vmatpush2.msra.mxu0 0.0
    %101 = vmatprep.subr.mxu0 0.0
    %102 = vmatpush2.msra.mxu0 0.0
    %103 = vmatprep.subr.mxu0 0.0
    %104 = vmatpush2.msra.mxu0 0.0
    %105 = vmatprep.subr.mxu0 0.0
    %106 = vmatpush2.msra.mxu0 0.0
    %107 = vmatprep.subr.mxu0 0.0
    %108 = vmatpush2.msra.mxu0 0.0
    %109 = vmatprep.mubr.f32.mxu0 0.0
    %110 = vmatmul.mubr.f32.gmra.mxu0 %v43
    %v111 = vpop.f32.mrf.mxu0
    %v112 = vadd.f32 %v39, %v111
    %v113 = vpop.f32.mrf.mxu0
    %114 = vdwg.mxu0
    %v115 = vmax.f32 %v112, 0.0
    %v116 = vld [vmem:[%s3] sm:$0xff]
    %v117 = vld [vmem:[%s3 + $0x8] sm:$0x3]
    %v118 = vld [vmem:[%s4] sm:$0x1]
    %v120 = vlaneseq
    %v121 = vshrl.u32 %v120, 7
    %v122 = vsub.s32 0, %v121
    %v123 = vrot.slane %v118, %v122
    %vm125 = vcmask 80896
    %v127 = vsel %vm125, %v115, 0
    %vm129 = vcmask 1041408
    %v131 = vsel %vm129, %v117, 0
    %133 = vmatprep.subr.mxu0 0.0
    %134 = vmatpush1.msra.mxu0 0.0
    %135 = vmatprep.subr.mxu0 0.0
    %136 = vmatpush1.msra.mxu0 0.0
    %137 = vmatprep.subr.mxu0 0.0
    %138 = vmatpush1.msra.mxu0 0.0
    %139 = vmatprep.subr.mxu0 0.0
    %140 = vmatpush1.msra.mxu0 0.0
    %141 = vmatprep.subr.mxu0 0.0
    %142 = vmatpush1.msra.mxu0 0.0
    %143 = vmatprep.subr.mxu0 0.0
    %144 = vmatpush1.msra.mxu0 0.0
    %145 = vmatprep.subr.mxu0 0.0
    %146 = vmatpush1.msra.mxu0 0.0
    %147 = vmatprep.subr.mxu0 0.0
    %148 = vmatpush1.msra.mxu0 0.0
    %149 = vmatprep.subr.mxu0 0.0
    %150 = vmatpush1.msra.mxu0 0.0
    %151 = vmatprep.subr.mxu0 0.0
    %152 = vmatpush1.msra.mxu0 0.0
    %153 = vmatprep.subr.mxu0 0.0
    %154 = vmatpush1.msra.mxu0 0.0
    %155 = vmatprep.subr.mxu0 0.0
    %156 = vmatpush1.msra.mxu0 0.0
    %157 = vmatprep.subr.mxu0 0.0
    %158 = vmatpush1.msra.mxu0 0.0
    %159 = vmatprep.subr.mxu0 0.0
    %160 = vmatpush1.msra.mxu0 0.0
    %161 = vmatprep.subr.mxu0 0.0
    %162 = vmatpush1.msra.mxu0 %v131
    %163 = vmatprep.subr.mxu0 0.0
    %164 = vmatpush1.msra.mxu0 %v116
    %165 = vmatprep.subr.mxu0 0.0
    %166 = vmatpush2.msra.mxu0 0.0
    %167 = vmatprep.subr.mxu0 0.0
    %168 = vmatpush2.msra.mxu0 0.0
    %169 = vmatprep.subr.mxu0 0.0
    %170 = vmatpush2.msra.mxu0 0.0
    %171 = vmatprep.subr.mxu0 0.0
    %172 = vmatpush2.msra.mxu0 0.0
    %173 = vmatprep.subr.mxu0 0.0
    %174 = vmatpush2.msra.mxu0 0.0
    %175 = vmatprep.subr.mxu0 0.0
    %176 = vmatpush2.msra.mxu0 0.0
    %177 = vmatprep.subr.mxu0 0.0
    %178 = vmatpush2.msra.mxu0 0.0
    %179 = vmatprep.subr.mxu0 0.0
    %180 = vmatpush2.msra.mxu0 0.0
    %181 = vmatprep.subr.mxu0 0.0
    %182 = vmatpush2.msra.mxu0 0.0
    %183 = vmatprep.subr.mxu0 0.0
    %184 = vmatpush2.msra.mxu0 0.0
    %185 = vmatprep.subr.mxu0 0.0
    %186 = vmatpush2.msra.mxu0 0.0
    %187 = vmatprep.subr.mxu0 0.0
    %188 = vmatpush2.msra.mxu0 0.0
    %189 = vmatprep.subr.mxu0 0.0
    %190 = vmatpush2.msra.mxu0 0.0
    %191 = vmatprep.subr.mxu0 0.0
    %192 = vmatpush2.msra.mxu0 0.0
    %193 = vmatprep.subr.mxu0 0.0
    %194 = vmatpush2.msra.mxu0 0.0
    %195 = vmatprep.subr.mxu0 0.0
    %196 = vmatpush2.msra.mxu0 0.0
    %197 = vmatprep.mubr.f32.mxu0 0.0
    %198 = vmatmul.mubr.f32.gmra.mxu0 %v127
    %v199 = vpop.f32.mrf.mxu0
    %v200 = vadd.f32 %v123, %v199
    %v201 = vpop.f32.mrf.mxu0
    %202 = vdwg.mxu0
    %v203 = vmax.f32 %v200, 0.0
    %v204 = vld [vmem:[%s5] sm:$0x1]
    %v205 = vld [vmem:[#allocation2] sm:$0x1]
    %207 = vset.pattern.permute.xlu0 0
    %208 = vperm.xlu0 %207, %v205
    %v209 = vpop.permute.xlu0 %208
    %v211 = vlaneseq
    %v212 = vshrl.u32 %v211, 7
    %v213 = vsub.s32 0, %v212
    %v214 = vrot.slane %v209, %v213
    %v216 = vsel %vm125, %v204, 0
    %v219 = vsel %vm125, %v203, 0
    %221 = vmatprep.subr.mxu0 0.0
    %222 = vmatpush1.xpose.msra.mxu0 0.0
    %223 = vmatprep.subr.mxu0 0.0
    %224 = vmatpush1.xpose.msra.mxu0 0.0
    %225 = vmatprep.subr.mxu0 0.0
    %226 = vmatpush1.xpose.msra.mxu0 0.0
    %227 = vmatprep.subr.mxu0 0.0
    %228 = vmatpush1.xpose.msra.mxu0 0.0
    %229 = vmatprep.subr.mxu0 0.0
    %230 = vmatpush1.xpose.msra.mxu0 0.0
    %231 = vmatprep.subr.mxu0 0.0
    %232 = vmatpush1.xpose.msra.mxu0 0.0
    %233 = vmatprep.subr.mxu0 0.0
    %234 = vmatpush1.xpose.msra.mxu0 0.0
    %235 = vmatprep.subr.mxu0 0.0
    %236 = vmatpush1.xpose.msra.mxu0 0.0
    %237 = vmatprep.subr.mxu0 0.0
    %238 = vmatpush1.xpose.msra.mxu0 0.0
    %239 = vmatprep.subr.mxu0 0.0
    %240 = vmatpush1.xpose.msra.mxu0 0.0
    %241 = vmatprep.subr.mxu0 0.0
    %242 = vmatpush1.xpose.msra.mxu0 0.0
    %243 = vmatprep.subr.mxu0 0.0
    %244 = vmatpush1.xpose.msra.mxu0 0.0
    %245 = vmatprep.subr.mxu0 0.0
    %246 = vmatpush1.xpose.msra.mxu0 0.0
    %247 = vmatprep.subr.mxu0 0.0
    %248 = vmatpush1.xpose.msra.mxu0 0.0
    %249 = vmatprep.subr.mxu0 0.0
    %250 = vmatpush1.xpose.msra.mxu0 0.0
    %251 = vmatprep.subr.mxu0 0.0
    %252 = vmatpush1.xpose.msra.mxu0 %v219
    %253 = vmatprep.subr.mxu0 0.0
    %254 = vmatpush2.xpose.msra.mxu0 0.0
    %255 = vmatprep.subr.mxu0 0.0
    %256 = vmatpush2.xpose.msra.mxu0 0.0
    %257 = vmatprep.subr.mxu0 0.0
    %258 = vmatpush2.xpose.msra.mxu0 0.0
    %259 = vmatprep.subr.mxu0 0.0
    %260 = vmatpush2.xpose.msra.mxu0 0.0
    %261 = vmatprep.subr.mxu0 0.0
    %262 = vmatpush2.xpose.msra.mxu0 0.0
    %263 = vmatprep.subr.mxu0 0.0
    %264 = vmatpush2.xpose.msra.mxu0 0.0
    %265 = vmatprep.subr.mxu0 0.0
    %266 = vmatpush2.xpose.msra.mxu0 0.0
    %267 = vmatprep.subr.mxu0 0.0
    %268 = vmatpush2.xpose.msra.mxu0 0.0
    %269 = vmatprep.subr.mxu0 0.0
    %270 = vmatpush2.xpose.msra.mxu0 0.0
    %271 = vmatprep.subr.mxu0 0.0
    %272 = vmatpush2.xpose.msra.mxu0 0.0
    %273 = vmatprep.subr.mxu0 0.0
    %274 = vmatpush2.xpose.msra.mxu0 0.0
    %275 = vmatprep.subr.mxu0 0.0
    %276 = vmatpush2.xpose.msra.mxu0 0.0
    %277 = vmatprep.subr.mxu0 0.0
    %278 = vmatpush2.xpose.msra.mxu0 0.0
    %279 = vmatprep.subr.mxu0 0.0
    %280 = vmatpush2.xpose.msra.mxu0 0.0
    %281 = vmatprep.subr.mxu0 0.0
    %282 = vmatpush2.xpose.msra.mxu0 0.0
    %283 = vmatprep.subr.mxu0 0.0
    %284 = vmatpush2.xpose.msra.mxu0 0.0
    %285 = vmatprep.mubr.f32.mxu0 0.0
    %286 = vmatmul.mubr.f32.gmra.mxu0 %v216
    %v287 = vpop.f32.mrf.mxu0
    %v288 = vadd.f32 %v214, %v287
    %v289 = vpop.f32.mrf.mxu0
    %290 = vdwg.mxu0
    %vm291 = vcmask 57344
    %292 = vst.msk [vmem:[#allocation3] sm:$0x1] %vm291, %v288
    // Predicated region
    $region30: #{tpu_custom_call.1} parent=1 // pred_check
      _
    $region31: #{tpu_custom_call.1} parent=1 // pred_check_branch
      %294 = sbr.rel (0) target = $region33
    $region32: #{tpu_custom_call.1} parent=1 // pred_region
      %s296 = ssub.s32 16, 16
      %297 = vsyncadd [#allocation4], %s296
      %s299 = sshll.u32 [#allocation3], 4
      %s300 = int_to_ptr.vmem [resolvable:$true] %s299
      %302 = dma.vmem_to_hbm [thread:$0]  %s300, 16, %s7, [#allocation4]
    $region33: #{tpu_custom_call.1} parent=1 // pred_fallthru
      _
    // Predicated region
    $region34: #{tpu_custom_call.1} parent=1 // pred_check
      _
    $region35: #{tpu_custom_call.1} parent=1 // pred_check_branch
      %304 = sbr.rel (0) target = $region37
    $region36: #{tpu_custom_call.1} parent=1 // pred_region
      %305 = dma.done [#allocation4], 16
    $region37: #{tpu_custom_call.1} parent=1 // pred_fallthru
      _
    %306 = vsyncpa [#allocation4], 1

</llo_original>
